<compile_context>
chip_gen: v6e
topology: v6e:2x2x1
jax: 0.10.0
libtpu: 0.0.40
codegen_flags: <defaults>
</compile_context>

<pallas_src>
import functools

import jax
import jax.numpy as jnp
from jax import lax
from jax.experimental import pallas as pl
from jax.experimental.pallas import tpu as pltpu

GAMMA = 2.0
IGNORE_INDEX = -100


def _cdiv(a, b):
    return (a + b - 1) // b


def _round_up(x, m):
    return ((x + m - 1) // m) * m


def _focal_loss_kernel(logits_ref, target_ref, sum_ref, *, gamma, ignore_index,
                       n_packed_rows, n_groups, n_classes):
    """One grid step: tile_rows packed rows, each holding n_groups logical rows."""
    i = pl.program_id(0)
    tile_rows = logits_ref.shape[0]

    t_all = target_ref[...]                                  # [tile_rows, n_groups] int32

    # Packed-row index; masks the ragged last grid block (its OOB rows contain
    # unspecified VMEM data, so they must never reach the reduction unmasked).
    prow = lax.broadcasted_iota(jnp.int32, (tile_rows, 1), 0) + i * tile_rows
    in_bounds = prow < n_packed_rows                          # [tile_rows, 1] bool

    acc = jnp.zeros((tile_rows, 1), jnp.float32)

    g_f = float(gamma)
    int_gamma = (g_f == int(g_f)) and 0 <= int(g_f) <= 4

    for g in range(n_groups):
        # Each lane group of width n_classes holds one logical row of logits.
        xg = logits_ref[:, pl.ds(g * n_classes, n_classes)].astype(jnp.float32)
        tg = t_all[:, g:g + 1]                                # [tile_rows, 1]
        valid = (tg != ignore_index) & in_bounds

        # log-sum-exp over the class lanes — the only full-width transcendental.
        m = jnp.max(xg, axis=1, keepdims=True)                # [tile_rows, 1]
        lse = jnp.log(jnp.sum(jnp.exp(xg - m), axis=1, keepdims=True))

        # Gather the target logit via one-hot select + lane reduce (no cross-lane
        # gather needed).  ignore_index never matches a column, so x_t is simply
        # masked out later via `valid`.
        col = lax.broadcasted_iota(jnp.int32, xg.shape, 1)
        x_t = jnp.sum(jnp.where(col == tg, xg, 0.0), axis=1, keepdims=True)

        logpt_t = (x_t - m) - lse                              # log p(target) per row
        pt_t = jnp.exp(logpt_t)
        one_minus_pt = 1.0 - pt_t

        if int_gamma:
            # Integer gamma (default 2): plain VPU multiplies, no generic pow.
            focal = jnp.ones_like(one_minus_pt)
            for _ in range(int(g_f)):
                focal = focal * one_minus_pt
        else:
            focal = one_minus_pt ** g_f                        # fallback: generic pow

        # Mask BEFORE the reduction (keeps garbage/ignored rows out of the sum).
        acc = acc + jnp.where(valid, -(focal * logpt_t), 0.0)

    tile_sum = jnp.sum(acc)

    # Lane-dense, unmasked (1, 128) store; only lane 0 carries the partial sum so
    # the wrapper can finish with a single contiguous jnp.sum over all tiles.
    lane = lax.broadcasted_iota(jnp.int32, sum_ref.shape, 1)
    sum_ref[...] = jnp.where(lane == 0, tile_sum, 0.0)


def _pick_tile(packed_rows, packed_width, in_dtype_bytes):
    """Row-tile size (in packed rows) and VMEM limit from the chip's VMEM capacity."""
    try:
        vmem_cap = int(pltpu.get_tpu_info().vmem_capacity_bytes)
    except Exception:
        vmem_cap = 64 * 1024 * 1024          # conservative (v7x per-core VMEM)
    vmem_limit = min(int(vmem_cap * 0.75), 96 * 1024 * 1024)

    # VMEM consumers per packed row: double-buffered input block in its native
    # dtype plus ~8 full-width f32 temporaries (conservative, leaves headroom for
    # Mosaic-internal scratch — matters most inside v7x's 64 MiB VMEM).
    per_row_vmem = packed_width * (2 * in_dtype_bytes + 8 * 4)
    tile_vmem = vmem_limit // per_row_vmem

    # Bytes-based cap instead of a fixed row cap: target ~8 MiB of streamed input
    # per block so the ~0.35 us per-grid-step overhead is amortized.
    tile_bytes = (8 * 1024 * 1024) // (packed_width * in_dtype_bytes)

    tile = max(8, min(tile_vmem, tile_bytes, 16384))
    tile = (tile // 8) * 8

    # Guarantee >= 2 grid steps where possible so both v7x TensorCores get work
    # (costs at most one extra grid step on the single-TC v5e/v6e).
    two_way = _round_up(_cdiv(packed_rows, 2), 8)
    tile = min(tile, max(two_way, 8))
    tile = min(tile, _round_up(packed_rows, 8))
    tile = max(tile, 8)
    return int(tile), int(vmem_limit)


def _logits_block_spec(tile_rows, width, in_dtype_bytes, num_tiles):
    index_map = lambda i: (i, 0)
    block_bytes = tile_rows * width * in_dtype_bytes
    if num_tiles >= 8 and block_bytes <= 2 * 1024 * 1024:
        # Vocab-scale C forces small row tiles; deepen the pipeline so the DMA
        # engine stays ahead of the short per-step compute (VMEM permitting).
        try:
            return pl.BlockSpec((tile_rows, width), index_map,
                                pipeline_mode=pl.Buffered(3))
        except Exception:
            pass
    return pl.BlockSpec((tile_rows, width), index_map)


def focal_loss(logits, targets, *, gamma=GAMMA, ignore_index=IGNORE_INDEX,
               block_rows=None, pack_small_c=True):
    """logits: [N, C] float (f32 or bf16); targets: [N] int. Returns scalar f32 loss."""
    N, C = logits.shape
    targets = targets.astype(jnp.int32)

    # Lane packing for small class counts: k logical rows per 128-lane line.
    if pack_small_c and 8 <= C < 128 and 128 % C == 0:
        k = 128 // C
    else:
        k = 1

    if k > 1:
        pad = (-N) % k
        if pad:
            logits_p = jnp.pad(logits, ((0, pad), (0, 0)))
            targets_p = jnp.pad(targets, (0, pad), constant_values=ignore_index)
        else:
            logits_p, targets_p = logits, targets
        P = (N + pad) // k
        logits_packed = logits_p.reshape(P, k * C)
        targets_packed = targets_p.reshape(P, k)
    else:
        P = N
        logits_packed = logits
        targets_packed = targets.reshape(N, 1)

    W = k * C
    in_bytes = jnp.dtype(logits.dtype).itemsize
    auto_tile, vmem_limit = _pick_tile(P, W, in_bytes)
    if block_rows is None:
        tile_rows = auto_tile
    else:
        tile_rows = max(8, (int(block_rows) // 8) * 8)
    num_tiles = _cdiv(P, tile_rows)

    kernel = functools.partial(
        _focal_loss_kernel, gamma=gamma, ignore_index=ignore_index,
        n_packed_rows=P, n_groups=k, n_classes=C)

    sums = pl.pallas_call(
        kernel,
        out_shape=jax.ShapeDtypeStruct((num_tiles, 128), jnp.float32),
        grid_spec=pltpu.PrefetchScalarGridSpec(
            num_scalar_prefetch=0,
            grid=(num_tiles,),
            in_specs=[
                _logits_block_spec(tile_rows, W, in_bytes, num_tiles),
                pl.BlockSpec((tile_rows, k), lambda i: (i, 0)),
            ],
            out_specs=pl.BlockSpec((1, 128), lambda i: (i, 0)),
        ),
        compiler_params=pltpu.CompilerParams(
            dimension_semantics=("parallel",),
            vmem_limit_bytes=vmem_limit,
        ),
    )(logits_packed, targets_packed)

    # Final reduction + mean over non-ignored rows (count done in the wrapper on
    # the raw targets — an essentially free XLA pass).
    # (If every row is ignored this yields NaN, matching F.nll_loss.)
    num = jnp.sum(sums)
    den = jnp.sum((targets != ignore_index).astype(jnp.float32))
    return num / den


def focal_loss_ref(logits, targets, *, gamma=GAMMA, ignore_index=IGNORE_INDEX):
    x = logits.astype(jnp.float32)
    logpt = jax.nn.log_softmax(x, axis=1)
    pt = jnp.exp(logpt)
    mod = ((1.0 - pt) ** gamma) * logpt
    valid = targets != ignore_index
    safe_t = jnp.where(valid, targets, 0)
    picked = jnp.take_along_axis(mod, safe_t[:, None], axis=1)[:, 0]
    num = jnp.sum(jnp.where(valid, -picked, 0.0))
    den = jnp.sum(valid.astype(jnp.float32))
    return num / den


if __name__ == "__main__":
    key = jax.random.PRNGKey(0)
    k1, k2, k3, k4, k5, k6 = jax.random.split(key, 6)

    # Test 1: NER-like small shape (batch=2, seq=8 -> N=16 tokens, C=32 labels).
    # C < 128 -> lane-packed path (4 logical rows per 128-lane line).
    N, C = 16, 32
    logits = jax.random.normal(k1, (N, C), dtype=jnp.float32)
    targets = jax.random.randint(k2, (N,), 0, C, dtype=jnp.int32)
    targets = targets.at[3].set(IGNORE_INDEX).at[10].set(IGNORE_INDEX)
    loss = jax.block_until_ready(focal_loss(logits, targets))
    ref = jax.block_until_ready(focal_loss_ref(logits, targets))
    assert jnp.allclose(loss, ref, rtol=2e-5, atol=1e-6), (loss, ref)

    # Test 2: C=128 (unpacked path), bf16 logits streamed in native dtype,
    # ragged N with several parallel grid tiles.
    N2, C2 = 20, 128
    logits2 = jax.random.normal(k3, (N2, C2), dtype=jnp.float32).astype(jnp.bfloat16)
    targets2 = jax.random.randint(k4, (N2,), 0, C2, dtype=jnp.int32)
    targets2 = targets2.at[0].set(IGNORE_INDEX).at[17].set(IGNORE_INDEX)
    loss2 = jax.block_until_ready(focal_loss(logits2, targets2, block_rows=8))
    ref2 = jax.block_until_ready(focal_loss_ref(logits2, targets2))
    assert jnp.allclose(loss2, ref2, rtol=1e-4, atol=1e-5), (loss2, ref2)

    # Test 3: packed path with N not a multiple of the packing factor and a
    # ragged multi-tile grid.
    N3, C3 = 70, 32
    logits3 = jax.random.normal(k5, (N3, C3), dtype=jnp.float32)
    targets3 = jax.random.randint(k6, (N3,), 0, C3, dtype=jnp.int32)
    targets3 = targets3.at[5].set(IGNORE_INDEX).at[44].set(IGNORE_INDEX)
    loss3 = jax.block_until_ready(focal_loss(logits3, targets3, block_rows=8))
    ref3 = jax.block_until_ready(focal_loss_ref(logits3, targets3))
    assert jnp.allclose(loss3, ref3, rtol=2e-5, atol=1e-6), (loss3, ref3)

    print("KERNEL_OK")
</pallas_src>

<mosaic_0001>
module attributes {stable_mosaic.version = 11 : i64} {
  func.func @_focal_loss_kernel(%arg0: i32, %arg1: memref<8x128xf32, #tpu.memory_space<vmem>>, %arg2: memref<8x4xi32, #tpu.memory_space<vmem>>, %arg3: memref<1x128xf32, #tpu.memory_space<vmem>>) attributes {dimension_semantics = [#tpu.dimension_semantics<parallel>], iteration_bounds = array<i64: 1>, scalar_prefetch = 0 : i64, scratch_operands = 0 : i64, tpu.core_type = #tpu.core_type<tc>, window_params = [{transform_indices = @transform_0, window_bounds = array<i64: 8, 128>}, {transform_indices = @transform_1, window_bounds = array<i64: 8, 4>}, {transform_indices = @transform_2, window_bounds = array<i64: 1, 128>}]} {
    %c0 = arith.constant 0 : index
    %c0_0 = arith.constant 0 : index
    %0 = vector.load %arg2[%c0, %c0_0] : memref<8x4xi32, #tpu.memory_space<vmem>>, vector<8x4xi32>
    %1 = tpu.iota {dimensions = array<i32: 0>} : vector<8x1xi32>
    %c8_i32 = arith.constant 8 : i32
    %2 = arith.muli %arg0, %c8_i32 : i32
    %3 = vector.broadcast %2 : i32 to vector<8x1xi32>
    %4 = arith.addi %1, %3 : vector<8x1xi32>
    %c4_i32 = arith.constant 4 : i32
    %5 = vector.broadcast %c4_i32 : i32 to vector<8x1xi32>
    %6 = arith.cmpi slt, %4, %5 : vector<8x1xi32>
    %cst = arith.constant 0.000000e+00 : f32
    %7 = vector.broadcast %cst : f32 to vector<8x1xf32>
    %c0_1 = arith.constant 0 : index
    %c0_2 = arith.constant 0 : index
    %8 = vector.load %arg1[%c0_1, %c0_2] : memref<8x128xf32, #tpu.memory_space<vmem>>, vector<8x32xf32>
    %9 = vector.extract_strided_slice %0 {offsets = [0, 0], sizes = [8, 1], strides = [1, 1]} : vector<8x4xi32> to vector<8x1xi32>
    %c-100_i32 = arith.constant -100 : i32
    %10 = vector.broadcast %c-100_i32 : i32 to vector<8x1xi32>
    %11 = arith.cmpi ne, %9, %10 : vector<8x1xi32>
    %12 = arith.andi %11, %6 : vector<8x1xi1>
    %cst_3 = arith.constant dense<0xFF800000> : vector<8xf32>
    %13 = vector.multi_reduction <maximumf>, %8, %cst_3 [1] : vector<8x32xf32> to vector<8xf32>
    %14 = vector.shape_cast %13 : vector<8xf32> to vector<8x1xf32>
    %15 = vector.broadcast %14 : vector<8x1xf32> to vector<8x32xf32>
    %16 = arith.subf %8, %15 : vector<8x32xf32>
    %17 = math.exp %16 : vector<8x32xf32>
    %cst_4 = arith.constant dense<0.000000e+00> : vector<8xf32>
    %18 = vector.multi_reduction <add>, %17, %cst_4 [1] : vector<8x32xf32> to vector<8xf32>
    %19 = vector.shape_cast %18 : vector<8xf32> to vector<8x1xf32>
    %20 = math.log %19 : vector<8x1xf32>
    %21 = tpu.iota {dimensions = array<i32: 1>} : vector<8x32xi32>
    %22 = vector.broadcast %9 : vector<8x1xi32> to vector<8x32xi32>
    %23 = arith.cmpi eq, %21, %22 : vector<8x32xi32>
    %cst_5 = arith.constant 0.000000e+00 : f32
    %24 = vector.broadcast %cst_5 : f32 to vector<8x32xf32>
    %25 = arith.select %23, %8, %24 : vector<8x32xi1>, vector<8x32xf32>
    %cst_6 = arith.constant dense<0.000000e+00> : vector<8xf32>
    %26 = vector.multi_reduction <add>, %25, %cst_6 [1] : vector<8x32xf32> to vector<8xf32>
    %27 = vector.shape_cast %26 : vector<8xf32> to vector<8x1xf32>
    %28 = arith.subf %27, %14 : vector<8x1xf32>
    %29 = arith.subf %28, %20 : vector<8x1xf32>
    %30 = math.exp %29 : vector<8x1xf32>
    %cst_7 = arith.constant 1.000000e+00 : f32
    %31 = vector.broadcast %cst_7 : f32 to vector<8x1xf32>
    %32 = arith.subf %31, %30 : vector<8x1xf32>
    %cst_8 = arith.constant 1.000000e+00 : f32
    %33 = vector.broadcast %cst_8 : f32 to vector<8x1xf32>
    %34 = arith.mulf %33, %32 : vector<8x1xf32>
    %35 = arith.mulf %34, %32 : vector<8x1xf32>
    %36 = arith.mulf %35, %29 : vector<8x1xf32>
    %cst_9 = arith.constant 0.000000e+00 : f32
    %37 = vector.broadcast %cst_9 : f32 to vector<8x1xf32>
    %38 = arith.subf %37, %36 : vector<8x1xf32>
    %cst_10 = arith.constant 0.000000e+00 : f32
    %39 = vector.broadcast %cst_10 : f32 to vector<8x1xf32>
    %40 = arith.select %12, %38, %39 : vector<8x1xi1>, vector<8x1xf32>
    %41 = arith.addf %7, %40 : vector<8x1xf32>
    %c0_11 = arith.constant 0 : index
    %c32 = arith.constant 32 : index
    %42 = vector.load %arg1[%c0_11, %c32] : memref<8x128xf32, #tpu.memory_space<vmem>>, vector<8x32xf32>
    %43 = vector.extract_strided_slice %0 {offsets = [0, 1], sizes = [8, 1], strides = [1, 1]} : vector<8x4xi32> to vector<8x1xi32>
    %c-100_i32_12 = arith.constant -100 : i32
    %44 = vector.broadcast %c-100_i32_12 : i32 to vector<8x1xi32>
    %45 = arith.cmpi ne, %43, %44 : vector<8x1xi32>
    %46 = arith.andi %45, %6 : vector<8x1xi1>
    %cst_13 = arith.constant dense<0xFF800000> : vector<8xf32>
    %47 = vector.multi_reduction <maximumf>, %42, %cst_13 [1] : vector<8x32xf32> to vector<8xf32>
    %48 = vector.shape_cast %47 : vector<8xf32> to vector<8x1xf32>
    %49 = vector.broadcast %48 : vector<8x1xf32> to vector<8x32xf32>
    %50 = arith.subf %42, %49 : vector<8x32xf32>
    %51 = math.exp %50 : vector<8x32xf32>
    %cst_14 = arith.constant dense<0.000000e+00> : vector<8xf32>
    %52 = vector.multi_reduction <add>, %51, %cst_14 [1] : vector<8x32xf32> to vector<8xf32>
    %53 = vector.shape_cast %52 : vector<8xf32> to vector<8x1xf32>
    %54 = math.log %53 : vector<8x1xf32>
    %55 = tpu.iota {dimensions = array<i32: 1>} : vector<8x32xi32>
    %56 = vector.broadcast %43 : vector<8x1xi32> to vector<8x32xi32>
    %57 = arith.cmpi eq, %55, %56 : vector<8x32xi32>
    %cst_15 = arith.constant 0.000000e+00 : f32
    %58 = vector.broadcast %cst_15 : f32 to vector<8x32xf32>
    %59 = arith.select %57, %42, %58 : vector<8x32xi1>, vector<8x32xf32>
    %cst_16 = arith.constant dense<0.000000e+00> : vector<8xf32>
    %60 = vector.multi_reduction <add>, %59, %cst_16 [1] : vector<8x32xf32> to vector<8xf32>
    %61 = vector.shape_cast %60 : vector<8xf32> to vector<8x1xf32>
    %62 = arith.subf %61, %48 : vector<8x1xf32>
    %63 = arith.subf %62, %54 : vector<8x1xf32>
    %64 = math.exp %63 : vector<8x1xf32>
    %cst_17 = arith.constant 1.000000e+00 : f32
    %65 = vector.broadcast %cst_17 : f32 to vector<8x1xf32>
    %66 = arith.subf %65, %64 : vector<8x1xf32>
    %cst_18 = arith.constant 1.000000e+00 : f32
    %67 = vector.broadcast %cst_18 : f32 to vector<8x1xf32>
    %68 = arith.mulf %67, %66 : vector<8x1xf32>
    %69 = arith.mulf %68, %66 : vector<8x1xf32>
    %70 = arith.mulf %69, %63 : vector<8x1xf32>
    %cst_19 = arith.constant 0.000000e+00 : f32
    %71 = vector.broadcast %cst_19 : f32 to vector<8x1xf32>
    %72 = arith.subf %71, %70 : vector<8x1xf32>
    %cst_20 = arith.constant 0.000000e+00 : f32
    %73 = vector.broadcast %cst_20 : f32 to vector<8x1xf32>
    %74 = arith.select %46, %72, %73 : vector<8x1xi1>, vector<8x1xf32>
    %75 = arith.addf %41, %74 : vector<8x1xf32>
    %c0_21 = arith.constant 0 : index
    %c64 = arith.constant 64 : index
    %76 = vector.load %arg1[%c0_21, %c64] : memref<8x128xf32, #tpu.memory_space<vmem>>, vector<8x32xf32>
    %77 = vector.extract_strided_slice %0 {offsets = [0, 2], sizes = [8, 1], strides = [1, 1]} : vector<8x4xi32> to vector<8x1xi32>
    %c-100_i32_22 = arith.constant -100 : i32
    %78 = vector.broadcast %c-100_i32_22 : i32 to vector<8x1xi32>
    %79 = arith.cmpi ne, %77, %78 : vector<8x1xi32>
    %80 = arith.andi %79, %6 : vector<8x1xi1>
    %cst_23 = arith.constant dense<0xFF800000> : vector<8xf32>
    %81 = vector.multi_reduction <maximumf>, %76, %cst_23 [1] : vector<8x32xf32> to vector<8xf32>
    %82 = vector.shape_cast %81 : vector<8xf32> to vector<8x1xf32>
    %83 = vector.broadcast %82 : vector<8x1xf32> to vector<8x32xf32>
    %84 = arith.subf %76, %83 : vector<8x32xf32>
    %85 = math.exp %84 : vector<8x32xf32>
    %cst_24 = arith.constant dense<0.000000e+00> : vector<8xf32>
    %86 = vector.multi_reduction <add>, %85, %cst_24 [1] : vector<8x32xf32> to vector<8xf32>
    %87 = vector.shape_cast %86 : vector<8xf32> to vector<8x1xf32>
    %88 = math.log %87 : vector<8x1xf32>
    %89 = tpu.iota {dimensions = array<i32: 1>} : vector<8x32xi32>
    %90 = vector.broadcast %77 : vector<8x1xi32> to vector<8x32xi32>
    %91 = arith.cmpi eq, %89, %90 : vector<8x32xi32>
    %cst_25 = arith.constant 0.000000e+00 : f32
    %92 = vector.broadcast %cst_25 : f32 to vector<8x32xf32>
    %93 = arith.select %91, %76, %92 : vector<8x32xi1>, vector<8x32xf32>
    %cst_26 = arith.constant dense<0.000000e+00> : vector<8xf32>
    %94 = vector.multi_reduction <add>, %93, %cst_26 [1] : vector<8x32xf32> to vector<8xf32>
    %95 = vector.shape_cast %94 : vector<8xf32> to vector<8x1xf32>
    %96 = arith.subf %95, %82 : vector<8x1xf32>
    %97 = arith.subf %96, %88 : vector<8x1xf32>
    %98 = math.exp %97 : vector<8x1xf32>
    %cst_27 = arith.constant 1.000000e+00 : f32
    %99 = vector.broadcast %cst_27 : f32 to vector<8x1xf32>
    %100 = arith.subf %99, %98 : vector<8x1xf32>
    %cst_28 = arith.constant 1.000000e+00 : f32
    %101 = vector.broadcast %cst_28 : f32 to vector<8x1xf32>
    %102 = arith.mulf %101, %100 : vector<8x1xf32>
    %103 = arith.mulf %102, %100 : vector<8x1xf32>
    %104 = arith.mulf %103, %97 : vector<8x1xf32>
    %cst_29 = arith.constant 0.000000e+00 : f32
    %105 = vector.broadcast %cst_29 : f32 to vector<8x1xf32>
    %106 = arith.subf %105, %104 : vector<8x1xf32>
    %cst_30 = arith.constant 0.000000e+00 : f32
    %107 = vector.broadcast %cst_30 : f32 to vector<8x1xf32>
    %108 = arith.select %80, %106, %107 : vector<8x1xi1>, vector<8x1xf32>
    %109 = arith.addf %75, %108 : vector<8x1xf32>
    %c0_31 = arith.constant 0 : index
    %c96 = arith.constant 96 : index
    %110 = vector.load %arg1[%c0_31, %c96] : memref<8x128xf32, #tpu.memory_space<vmem>>, vector<8x32xf32>
    %111 = vector.extract_strided_slice %0 {offsets = [0, 3], sizes = [8, 1], strides = [1, 1]} : vector<8x4xi32> to vector<8x1xi32>
    %c-100_i32_32 = arith.constant -100 : i32
    %112 = vector.broadcast %c-100_i32_32 : i32 to vector<8x1xi32>
    %113 = arith.cmpi ne, %111, %112 : vector<8x1xi32>
    %114 = arith.andi %113, %6 : vector<8x1xi1>
    %cst_33 = arith.constant dense<0xFF800000> : vector<8xf32>
    %115 = vector.multi_reduction <maximumf>, %110, %cst_33 [1] : vector<8x32xf32> to vector<8xf32>
    %116 = vector.shape_cast %115 : vector<8xf32> to vector<8x1xf32>
    %117 = vector.broadcast %116 : vector<8x1xf32> to vector<8x32xf32>
    %118 = arith.subf %110, %117 : vector<8x32xf32>
    %119 = math.exp %118 : vector<8x32xf32>
    %cst_34 = arith.constant dense<0.000000e+00> : vector<8xf32>
    %120 = vector.multi_reduction <add>, %119, %cst_34 [1] : vector<8x32xf32> to vector<8xf32>
    %121 = vector.shape_cast %120 : vector<8xf32> to vector<8x1xf32>
    %122 = math.log %121 : vector<8x1xf32>
    %123 = tpu.iota {dimensions = array<i32: 1>} : vector<8x32xi32>
    %124 = vector.broadcast %111 : vector<8x1xi32> to vector<8x32xi32>
    %125 = arith.cmpi eq, %123, %124 : vector<8x32xi32>
    %cst_35 = arith.constant 0.000000e+00 : f32
    %126 = vector.broadcast %cst_35 : f32 to vector<8x32xf32>
    %127 = arith.select %125, %110, %126 : vector<8x32xi1>, vector<8x32xf32>
    %cst_36 = arith.constant dense<0.000000e+00> : vector<8xf32>
    %128 = vector.multi_reduction <add>, %127, %cst_36 [1] : vector<8x32xf32> to vector<8xf32>
    %129 = vector.shape_cast %128 : vector<8xf32> to vector<8x1xf32>
    %130 = arith.subf %129, %116 : vector<8x1xf32>
    %131 = arith.subf %130, %122 : vector<8x1xf32>
    %132 = math.exp %131 : vector<8x1xf32>
    %cst_37 = arith.constant 1.000000e+00 : f32
    %133 = vector.broadcast %cst_37 : f32 to vector<8x1xf32>
    %134 = arith.subf %133, %132 : vector<8x1xf32>
    %cst_38 = arith.constant 1.000000e+00 : f32
    %135 = vector.broadcast %cst_38 : f32 to vector<8x1xf32>
    %136 = arith.mulf %135, %134 : vector<8x1xf32>
    %137 = arith.mulf %136, %134 : vector<8x1xf32>
    %138 = arith.mulf %137, %131 : vector<8x1xf32>
    %cst_39 = arith.constant 0.000000e+00 : f32
    %139 = vector.broadcast %cst_39 : f32 to vector<8x1xf32>
    %140 = arith.subf %139, %138 : vector<8x1xf32>
    %cst_40 = arith.constant 0.000000e+00 : f32
    %141 = vector.broadcast %cst_40 : f32 to vector<8x1xf32>
    %142 = arith.select %114, %140, %141 : vector<8x1xi1>, vector<8x1xf32>
    %143 = arith.addf %109, %142 : vector<8x1xf32>
    %144 = vector.shape_cast %143 : vector<8x1xf32> to vector<1x8x1xf32>
    %cst_41 = arith.constant dense<0.000000e+00> : vector<1xf32>
    %145 = vector.multi_reduction <add>, %144, %cst_41 [1, 2] : vector<1x8x1xf32> to vector<1xf32>
    %146 = vector.shape_cast %145 : vector<1xf32> to vector<1x1x1xf32>
    %147 = vector.extract %146[0, 0, 0] : f32 from vector<1x1x1xf32>
    %148 = tpu.iota {dimensions = array<i32: 1>} : vector<1x128xi32>
    %c0_i32 = arith.constant 0 : i32
    %149 = vector.broadcast %c0_i32 : i32 to vector<1x128xi32>
    %150 = arith.cmpi eq, %148, %149 : vector<1x128xi32>
    %cst_42 = arith.constant 0.000000e+00 : f32
    %151 = vector.broadcast %147 : f32 to vector<1x128xf32>
    %152 = vector.broadcast %cst_42 : f32 to vector<1x128xf32>
    %153 = arith.select %150, %151, %152 : vector<1x128xi1>, vector<1x128xf32>
    %c0_43 = arith.constant 0 : index
    %c0_44 = arith.constant 0 : index
    %154 = vector.load %arg3[%c0_43, %c0_44] : memref<1x128xf32, #tpu.memory_space<vmem>>, vector<1x128xf32>
    tpu.vector_store %arg3[%c0_43, %c0_44], %153 {strides = array<i32>} : memref<1x128xf32, #tpu.memory_space<vmem>>, vector<1x128xf32>,
    return
  }
  func.func @transform_0(%arg0: i32) -> (i32, i32) {
    %c0_i32 = arith.constant 0 : i32
    %c0_i32_0 = arith.constant 0 : i32
    return %arg0, %c0_i32 : i32, i32
  }
  func.func @transform_1(%arg0: i32) -> (i32, i32) {
    %c0_i32 = arith.constant 0 : i32
    %c0_i32_0 = arith.constant 0 : i32
    return %arg0, %c0_i32 : i32, i32
  }
  func.func @transform_2(%arg0: i32) -> (i32, i32) {
    %c0_i32 = arith.constant 0 : i32
    %c0_i32_0 = arith.constant 0 : i32
    return %arg0, %c0_i32 : i32, i32
  }
}

</mosaic_0001>

<llo_original>
// kernel: tpu_custom_call.1
$region0: #{tpu_custom_call.1}
  #allocation0 [shape = 'u32[]', space=smem, size = 0x4, offset = 0x4, fixed_abs, tag = 'smem constant byte address 0x4 - core index']
  #allocation1 [shape = 'u32[144,128]{1,0:T(1,128)}', space=vmem, size = 0x12000, scoped, tag = 'internal scratch']
  %s0 = inlined_call_operand.hbm [shape: f32[4,128], index: 0, kind: input, shape index: {}]
  %s1 = inlined_call_operand.hbm [shape: s32[4,4], index: 1, kind: input, shape index: {}]
  %s2 = inlined_call_operand.hbm [shape: f32[1,128], index: 2, kind: output, shape index: {}]
  %s3 = sld [smem:[#allocation0]]
  $region26: #{tpu_custom_call.1} parent=0
    _
  %s5 = ssub.s32 1, %s3
  %s6 = scalar_select 0, %s5, %s3
  $region1: #{tpu_custom_call.1} parent=0
    #allocation2 [shape = 'u8[4096]{0}', space=vmem, size = 0x1000, scoped, tag = 'input window, operand 0, single buffered']
    #allocation3 [shape = 's32[1]{0}', space=sflag, size = 0x4, scoped, tag = 'scoped memory for tpu_custom_call.1']
    #allocation4 [shape = 's32[1]{0}', space=sflag, size = 0x4, scoped, tag = 'scoped memory for tpu_custom_call.1']
    #allocation5 [shape = 'u8[4096]{0}', space=vmem, size = 0x1000, scoped, tag = 'input window, operand 1, single buffered']
    #allocation6 [shape = 's32[1]{0}', space=sflag, size = 0x4, scoped, tag = 'scoped memory for tpu_custom_call.1']
    #allocation7 [shape = 'u8[512]{0}', space=vmem, size = 0x400, scoped, tag = 'output window, operand 0, single buffered']
    %7 = vsyncpa [#allocation3], 0
    %8 = vsyncpa [#allocation6], 0
    %9 = vsyncpa [#allocation4], 0
    // Predicated region
    $region2: #{tpu_custom_call.1} parent=1 // pred_check
      _
    $region3: #{tpu_custom_call.1} parent=1 // pred_check_branch
      %11 = sbr.rel (0) target = $region5
    $region4: #{tpu_custom_call.1} parent=1 // pred_region
      %s13 = ssub.s32 128, 64
      %14 = vsyncadd [#allocation3], %s13
      %s15 = sshll.u32 [#allocation2], 4
      %s16 = int_to_ptr.vmem [resolvable:$true] %s15
      %21 = dma.hbm_to_vmem [thread:$0]  %s0, 64, %s16, [#allocation3], 64, 64, 4
    $region5: #{tpu_custom_call.1} parent=1 // pred_fallthru
      _
    // Predicated region
    $region6: #{tpu_custom_call.1} parent=1 // pred_check
      _
    $region7: #{tpu_custom_call.1} parent=1 // pred_check_branch
      %23 = sbr.rel (0) target = $region9
    $region8: #{tpu_custom_call.1} parent=1 // pred_region
      %s25 = ssub.s32 128, 64
      %26 = vsyncadd [#allocation6], %s25
      %s27 = sshll.u32 [#allocation5], 4
      %s28 = int_to_ptr.vmem [resolvable:$true] %s27
      %33 = dma.hbm_to_vmem [thread:$0]  %s1, 64, %s28, [#allocation6], 64, 64, 4
    $region9: #{tpu_custom_call.1} parent=1 // pred_fallthru
      _
    // Predicated region
    $region10: #{tpu_custom_call.1} parent=1 // pred_check
      _
    $region11: #{tpu_custom_call.1} parent=1 // pred_check_branch
      %35 = sbr.rel (0) target = $region13
    $region12: #{tpu_custom_call.1} parent=1 // pred_region
      %36 = dma.done [#allocation3], 128
    $region13: #{tpu_custom_call.1} parent=1 // pred_fallthru
      _
    // Predicated region
    $region14: #{tpu_custom_call.1} parent=1 // pred_check
      _
    $region15: #{tpu_custom_call.1} parent=1 // pred_check_branch
      %38 = sbr.rel (0) target = $region17
    $region16: #{tpu_custom_call.1} parent=1 // pred_region
      %39 = dma.done [#allocation6], 128
    $region17: #{tpu_custom_call.1} parent=1 // pred_fallthru
      _
    %v40 = vld [vmem:[#allocation5] sm:$0xff]
    %v41 = vlaneseq
    %v42 = vshrl.u32 %v41, 7
    %s43 = smul.u32 0, 8
    %v44 = vstv %s43
    %v45 = vadd.s32 %v42, %v44
    %vm46 = vcmp.lt.s32.totalorder %v45, 4
    %v47 = vld [vmem:[#allocation2] sm:$0xff]
    %vm48 = vcmp.ne.s32.totalorder %v40, 4294967196
    %vm49 = vmand %vm48, %vm46
    %vm50 = vcmask 261120
    %v51 = vsel %vm50, %v47, -inf
    %52 = vmax.xlane.f32.xlu0 %v51
    %v53 = vpop.xlane.xlu0 %52
    %v54 = vsub.f32 %v47, %v53
    %v55 = vmul.f32 %v54, 1.442695
    %v56 = vpow.pop %v55
    %v57 = vsel %vm50, %v56, 0.0
    %58 = vadd.xlane.f32.xlu0 %v57
    %v59 = vpop.xlane.xlu0 %58
    %v60 = vlog2.pop %v59
    %v61 = vmul.f32 %v60, 0.6931472
    %v62 = vlaneseq
    %v63 = vand.u32 %v62, 127
    %64 = vset.pattern.permute.xlu0 0
    %65 = vperm.xlu0 %64, %v40
    %v66 = vpop.permute.xlu0 %65
    %vm67 = vcmp.eq.s32.totalorder %v63, %v66
    %v68 = vsel %vm67, %v47, 0.0
    %v69 = vsel %vm50, %v68, 0.0
    %70 = vadd.xlane.f32.xlu0 %v69
    %v71 = vpop.xlane.xlu0 %70
    %v72 = vsub.f32 %v71, %v53
    %v73 = vsub.f32 %v72, %v61
    %v74 = vmul.f32 %v73, 1.442695
    %v75 = vpow.pop %v74
    %v76 = vsub.f32 1.0, %v75
    %v77 = vmul.f32 %v76, %v76
    %v78 = vmul.f32 %v77, %v73
    %v79 = vsub.f32 0.0, %v78
    %v80 = vsel %vm49, %v79, 0.0
    %v81 = vadd.f32 %v80, 0.0
    %vm82 = vcmask 523520
    %v83 = vsel %vm82, %v47, -inf
    %84 = vmax.xlane.f32.xlu0 %v83
    %v85 = vpop.xlane.xlu0 %84
    %v86 = vsub.f32 %v47, %v85
    %v87 = vmul.f32 %v86, 1.442695
    %v88 = vpow.pop %v87
    %90 = vrot.lane.b32.xlu0 %v88, 96
    %v91 = vpop.permute.xlu0 %90
    %v93 = vsel %vm50, %v91, 0.0
    %94 = vadd.xlane.f32.xlu0 %v93
    %v95 = vpop.xlane.xlu0 %94
    %v96 = vlog2.pop %v95
    %v97 = vmul.f32 %v96, 0.6931472
    %98 = vset.pattern.permute.xlu0 1
    %99 = vperm.xlu0 %98, %v40
    %v100 = vpop.permute.xlu0 %99
    %vm101 = vcmp.eq.s32.totalorder %v63, %v100
    %103 = vrot.lane.b32.xlu0 %v47, 96
    %v104 = vpop.permute.xlu0 %103
    %v106 = vsel %vm101, %v104, 0.0
    %v107 = vsel %vm50, %v106, 0.0
    %108 = vadd.xlane.f32.xlu0 %v107
    %v109 = vpop.xlane.xlu0 %108
    %v110 = vsub.f32 %v109, %v85
    %v111 = vsub.f32 %v110, %v97
    %v112 = vmul.f32 %v111, 1.442695
    %v113 = vpow.pop %v112
    %v114 = vsub.f32 1.0, %v113
    %v115 = vmul.f32 %v114, %v114
    %v116 = vmul.f32 %v115, %v111
    %v117 = vsub.f32 0.0, %v116
    %v118 = vsel %vm49, %v117, 0.0
    %120 = vrot.lane.b32.xlu0 %v118, 127
    %v121 = vpop.permute.xlu0 %120
    %v123 = vadd.f32 %v81, %v121
    %vm124 = vcmask 785920
    %v125 = vsel %vm124, %v47, -inf
    %126 = vmax.xlane.f32.xlu0 %v125
    %v127 = vpop.xlane.xlu0 %126
    %v128 = vsub.f32 %v47, %v127
    %v129 = vmul.f32 %v128, 1.442695
    %v130 = vpow.pop %v129
    %132 = vrot.lane.b32.xlu0 %v130, 64
    %v133 = vpop.permute.xlu0 %132
    %v135 = vsel %vm50, %v133, 0.0
    %136 = vadd.xlane.f32.xlu0 %v135
    %v137 = vpop.xlane.xlu0 %136
    %v138 = vlog2.pop %v137
    %v139 = vmul.f32 %v138, 0.6931472
    %140 = vset.pattern.permute.xlu0 2
    %141 = vperm.xlu0 %140, %v40
    %v142 = vpop.permute.xlu0 %141
    %vm143 = vcmp.eq.s32.totalorder %v63, %v142
    %144 = vrot.lane.b32.xlu0 %v47, 64
    %v145 = vpop.permute.xlu0 %144
    %v147 = vsel %vm143, %v145, 0.0
    %v148 = vsel %vm50, %v147, 0.0
    %149 = vadd.xlane.f32.xlu0 %v148
    %v150 = vpop.xlane.xlu0 %149
    %v151 = vsub.f32 %v150, %v127
    %v152 = vsub.f32 %v151, %v139
    %v153 = vmul.f32 %v152, 1.442695
    %v154 = vpow.pop %v153
    %v155 = vsub.f32 1.0, %v154
    %v156 = vmul.f32 %v155, %v155
    %v157 = vmul.f32 %v156, %v152
    %v158 = vsub.f32 0.0, %v157
    %v159 = vsel %vm49, %v158, 0.0
    %161 = vrot.lane.b32.xlu0 %v159, 126
    %v162 = vpop.permute.xlu0 %161
    %v164 = vadd.f32 %v123, %v162
    %vm165 = vcmask 1048320
    %v166 = vsel %vm165, %v47, -inf
    %167 = vmax.xlane.f32.xlu0 %v166
    %v168 = vpop.xlane.xlu0 %167
    %v169 = vsub.f32 %v47, %v168
    %v170 = vmul.f32 %v169, 1.442695
    %v171 = vpow.pop %v170
    %173 = vrot.lane.b32.xlu0 %v171, 32
    %v174 = vpop.permute.xlu0 %173
    %v176 = vsel %vm50, %v174, 0.0
    %177 = vadd.xlane.f32.xlu0 %v176
    %v178 = vpop.xlane.xlu0 %177
    %v179 = vlog2.pop %v178
    %v180 = vmul.f32 %v179, 0.6931472
    %181 = vset.pattern.permute.xlu0 3
    %182 = vperm.xlu0 %181, %v40
    %v183 = vpop.permute.xlu0 %182
    %vm184 = vcmp.eq.s32.totalorder %v63, %v183
    %185 = vrot.lane.b32.xlu0 %v47, 32
    %v186 = vpop.permute.xlu0 %185
    %v188 = vsel %vm184, %v186, 0.0
    %v189 = vsel %vm50, %v188, 0.0
    %190 = vadd.xlane.f32.xlu0 %v189
    %v191 = vpop.xlane.xlu0 %190
    %v192 = vsub.f32 %v191, %v168
    %v193 = vsub.f32 %v192, %v180
    %v194 = vmul.f32 %v193, 1.442695
    %v195 = vpow.pop %v194
    %v196 = vsub.f32 1.0, %v195
    %v197 = vmul.f32 %v196, %v196
    %v198 = vmul.f32 %v197, %v193
    %v199 = vsub.f32 0.0, %v198
    %v200 = vsel %vm49, %v199, 0.0
    %202 = vrot.lane.b32.xlu0 %v200, 125
    %v203 = vpop.permute.xlu0 %202
    %v205 = vadd.f32 %v164, %v203
    %vm206 = vcmask 7168
    %v207 = vsel %vm206, %v205, 0.0
    %208 = vadd.xlane.f32.xlu0 %v207
    %v209 = vpop.xlane.xlu0 %208
    %v210 = vrot.slane %v209, 4
    %v211 = vadd.f32 %v209, %v210
    %v212 = vrot.slane %v211, 2
    %v213 = vadd.f32 %v211, %v212
    %v214 = vrot.slane %v213, 1
    %v215 = vadd.f32 %v213, %v214
    %s216 = vtos %v215
    %vm217 = vcmp.eq.s32.totalorder %v63, 0
    %v218 = vstv %s216
    %v219 = vsel %vm217, %v218, 0.0
    %220 = vst [vmem:[#allocation7] sm:$0x1] %v219
    // Predicated region
    $region18: #{tpu_custom_call.1} parent=1 // pred_check
      _
    $region19: #{tpu_custom_call.1} parent=1 // pred_check_branch
      %222 = sbr.rel (0) target = $region21
    $region20: #{tpu_custom_call.1} parent=1 // pred_region
      %s224 = ssub.s32 16, 16
      %225 = vsyncadd [#allocation4], %s224
      %s227 = sshll.u32 [#allocation7], 4
      %s228 = int_to_ptr.vmem [resolvable:$true] %s227
      %230 = dma.vmem_to_hbm [thread:$0]  %s228, 16, %s2, [#allocation4]
    $region21: #{tpu_custom_call.1} parent=1 // pred_fallthru
      _
    // Predicated region
    $region22: #{tpu_custom_call.1} parent=1 // pred_check
      _
    $region23: #{tpu_custom_call.1} parent=1 // pred_check_branch
      %232 = sbr.rel (0) target = $region25
    $region24: #{tpu_custom_call.1} parent=1 // pred_region
      %233 = dma.done [#allocation4], 16
    $region25: #{tpu_custom_call.1} parent=1 // pred_fallthru
      _
    %234 = vsyncpa [#allocation3], 1
    %235 = vsyncpa [#allocation6], 1
    %236 = vsyncpa [#allocation4], 1

</llo_original>
